<compile_context>
chip_gen: v7x
topology: tpu7x:2x2x1
jax: 0.10.0
libtpu: 0.0.40
codegen_flags: <defaults>
</compile_context>

<pallas_src>
import functools

import numpy as np
import jax
import jax.numpy as jnp
from jax.experimental import pallas as pl
from jax.experimental.pallas import tpu as pltpu


# ---------------------------------------------------------------------------
# Host-side weight construction.
#
# Flattened lane index f = t*C + c.  With roll_fwd_j[f] = x[(t+j) mod L, c]
# and roll_bwd_j[f] = x[(t-j) mod L, c] (shift multiples of C never mix
# channels), the replicate-padded moving average is
#
#   trend = W0 . x + sum_j ( Wf_j . roll_fwd_j + Wb_j . roll_bwd_j )
#
# where the per-lane constants W* carry 1/k_c, the tap-validity mask and the
# clipped-edge copies (x[0,c] / x[L-1,c]) folded onto the roll that already
# holds that edge value at the position needing the correction.
# ---------------------------------------------------------------------------
def _build_weights(ker_sizes, L):
    C = len(ker_sizes)
    hs = [(int(k) - 1) // 2 for k in ker_sizes]
    h_max = max(hs) if hs else 0
    n_rows = 2 * h_max + 1
    W = np.zeros((n_rows, L, C), np.float32)
    t = np.arange(L)
    for c, (k, hc) in enumerate(zip(ker_sizes, hs)):
        w = 1.0 / float(k)
        # center tap
        W[0, :, c] = w
        # left/right clip corrections that land on the center tap (t==0 / t==L-1)
        W[0, 0, c] += w * hc
        W[0, L - 1, c] += w * hc
        for j in range(1, h_max + 1):
            if j <= hc:
                # forward tap +j : valid where t+j <= L-1
                W[j, :, c] += np.where(t <= L - 1 - j, w, 0.0)
                # backward tap -j : valid where t-j >= 0
                W[h_max + j, :, c] += np.where(t >= j, w, 0.0)
            extra = w * max(hc - j, 0)
            if extra > 0.0:
                if L - 1 - j >= 0:
                    # roll_fwd_j holds x[L-1,c] at t = L-1-j -> fold right-edge copies
                    W[j, L - 1 - j, c] += extra
                if j <= L - 1:
                    # roll_bwd_j holds x[0,c] at t = j -> fold left-edge copies
                    W[h_max + j, j, c] += extra
    return W.reshape(n_rows, L * C), h_max


# ---------------------------------------------------------------------------
# Pallas kernel: blocks are (tb, L*C), time*channel on the lane axis.
# Per tap: one XLU roll + one mul + one add.  No compares, no selects.
# ---------------------------------------------------------------------------
def _decomp_kernel(x_ref, w_ref, trend_ref, resid_ref, *, h_max, chan, lanes):
    x = x_ref[...].astype(jnp.float32)              # (tb, L*C)
    acc = x * w_ref[0:1, :]                         # center tap (+ folded edges)
    for j in range(1, h_max + 1):                   # h_max is small; static unroll
        s_bwd = (j * chan) % lanes                  # out[f] = x[f - s]  -> x[t-j]
        s_fwd = (lanes - s_bwd) % lanes             # out[f] = x[f + jC] -> x[t+j]
        fwd = pltpu.roll(x, shift=s_fwd, axis=1)
        acc = acc + fwd * w_ref[j:j + 1, :]
        bwd = pltpu.roll(x, shift=s_bwd, axis=1)
        acc = acc + bwd * w_ref[h_max + j:h_max + j + 1, :]
    trend_ref[...] = acc.astype(trend_ref.dtype)
    resid_ref[...] = (x - acc).astype(resid_ref.dtype)


# ---------------------------------------------------------------------------
# VMEM-budget-aware tiling.
# ---------------------------------------------------------------------------
def _vmem_capacity_bytes():
    try:
        info = pltpu.get_tpu_info()
        cap = int(getattr(info, "vmem_capacity_bytes", 0))
        if cap > 0:
            return cap
    except Exception:
        pass
    return 64 * 1024 * 1024  # conservative fallback (v7x per-TensorCore VMEM)


def _plan_tiles(B, LC, itemsize, vmem_cap):
    # sublane granularity: packed dtypes need more rows per vreg
    if itemsize >= 4:
        g = 8
    elif itemsize == 2:
        g = 16
    else:
        g = 32
    budget = int(vmem_cap * 0.45)            # headroom for weights / scratch / other bufs
    per_row = 2 * 3 * LC * itemsize          # x, trend, resid; each double-buffered
    tb = (budget // max(per_row, 1)) // g * g
    tb = max(g, min(tb, 1024))               # >=1 vreg of rows; >=~1 MiB blocks amortize step cost
    b_ceil = ((B + g - 1) // g) * g
    tb = min(tb, b_ceil)
    B_pad = ((B + tb - 1) // tb) * tb
    return tb, B_pad


# ---------------------------------------------------------------------------
# Wrapper: same semantics as the PyTorch module forward.
#   x: (B, L, C)  ->  (trends, residual), both (B, L, C)
# ---------------------------------------------------------------------------
def multi_series_decomp(x, feature_ker_size):
    B, L, C = x.shape
    ks = tuple(int(k) for k in feature_ker_size)
    assert len(ks) == C, "one kernel size per feature channel"
    assert all(k >= 1 and k % 2 == 1 for k in ks), "kernel sizes must be odd"

    W_np, h_max = _build_weights(ks, L)
    n_rows = W_np.shape[0]
    LC = L * C
    itemsize = x.dtype.itemsize

    # Free reshape: (B, L, C) -> (B, L*C).  No HBM transpose anywhere.
    xf = x.reshape(B, LC)

    vmem_cap = _vmem_capacity_bytes()
    tb, B_pad = _plan_tiles(B, LC, itemsize, vmem_cap)
    if B_pad != B:
        xf = jnp.pad(xf, ((0, B_pad - B), (0, 0)))

    weights = jnp.asarray(W_np)  # (n_rows, L*C) f32, tiny; DMA'd once (constant index_map)

    need = 2 * 3 * tb * LC * itemsize + 2 * ((n_rows + 7) // 8 * 8) * LC * 4
    vmem_limit = int(min(vmem_cap * 0.9, max(need * 1.5 + (4 << 20), 32 << 20)))

    kernel = functools.partial(_decomp_kernel, h_max=h_max, chan=C, lanes=LC)
    blk = pl.BlockSpec((tb, LC), lambda i: (i, 0))
    w_blk = pl.BlockSpec((n_rows, LC), lambda i: (0, 0))

    trend_f, resid_f = pl.pallas_call(
        kernel,
        out_shape=(
            jax.ShapeDtypeStruct((B_pad, LC), x.dtype),
            jax.ShapeDtypeStruct((B_pad, LC), x.dtype),
        ),
        grid=(B_pad // tb,),
        in_specs=[blk, w_blk],
        out_specs=(blk, blk),
        compiler_params=pltpu.CompilerParams(
            dimension_semantics=("parallel",),
            vmem_limit_bytes=vmem_limit,
        ),
    )(xf, weights)

    trends = trend_f[:B].reshape(B, L, C)
    residual = resid_f[:B].reshape(B, L, C)
    return trends, residual


# ---------------------------------------------------------------------------
# Pure-JAX reference (mirrors the PyTorch forward exactly: replicate padding
# is identical to clipping the gather indices).
# ---------------------------------------------------------------------------
def reference_decomp(x, feature_ker_size):
    B, L, C = x.shape
    trends = []
    for i, k in enumerate(feature_ker_size):
        h = (k - 1) // 2
        xc = x[:, :, i]  # (B, L)
        idx = jnp.clip(
            jnp.arange(L)[:, None] + jnp.arange(-h, h + 1)[None, :], 0, L - 1
        )  # (L, k)
        tr = jnp.mean(xc[:, idx], axis=-1)  # (B, L)
        trends.append(tr)
    trends = jnp.stack(trends, axis=-1)
    return trends, x - trends


if __name__ == "__main__":
    # Small shapes consistent with the module: batch=2, channels=4, and a
    # look-back window of 128 time steps.
    B, L = 2, 128
    feature_ker_size = [3, 5, 7, 9]
    C = len(feature_ker_size)

    key = jax.random.PRNGKey(0)
    x = jax.random.normal(key, (B, L, C), dtype=jnp.float32)

    trends, residual = multi_series_decomp(x, feature_ker_size)
    jax.block_until_ready((trends, residual))

    trends_ref, residual_ref = reference_decomp(x, feature_ker_size)
    assert trends.shape == (B, L, C) and residual.shape == (B, L, C)
    assert np.allclose(np.asarray(trends), np.asarray(trends_ref),
                       atol=1e-5, rtol=1e-5), "trend mismatch"
    assert np.allclose(np.asarray(residual), np.asarray(residual_ref),
                       atol=1e-5, rtol=1e-5), "residual mismatch"

    print("KERNEL_OK")
</pallas_src>

<mosaic_0001>
module attributes {stable_mosaic.version = 11 : i64} {
  func.func @_decomp_kernel(%arg0: i32, %arg1: memref<8x512xf32, #tpu.memory_space<vmem>>, %arg2: memref<9x512xf32, #tpu.memory_space<vmem>>, %arg3: memref<8x512xf32, #tpu.memory_space<vmem>>, %arg4: memref<8x512xf32, #tpu.memory_space<vmem>>) attributes {dimension_semantics = [#tpu.dimension_semantics<parallel>], iteration_bounds = array<i64: 1>, scalar_prefetch = 0 : i64, scratch_operands = 0 : i64, tpu.core_type = #tpu.core_type<tc>, window_params = [{transform_indices = @transform_0, window_bounds = array<i64: 8, 512>}, {pipeline_mode = #tpu.pipeline_mode<synchronous>, transform_indices = @transform_1, window_bounds = array<i64: 9, 512>}, {transform_indices = @transform_2, window_bounds = array<i64: 8, 512>}, {transform_indices = @transform_3, window_bounds = array<i64: 8, 512>}]} {
    %c0 = arith.constant 0 : index
    %c0_0 = arith.constant 0 : index
    %0 = vector.load %arg1[%c0, %c0_0] : memref<8x512xf32, #tpu.memory_space<vmem>>, vector<8x512xf32>
    %c0_1 = arith.constant 0 : index
    %c0_2 = arith.constant 0 : index
    %1 = vector.load %arg2[%c0_1, %c0_2] : memref<9x512xf32, #tpu.memory_space<vmem>>, vector<1x512xf32>
    %2 = vector.broadcast %1 : vector<1x512xf32> to vector<8x512xf32>
    %3 = arith.mulf %0, %2 : vector<8x512xf32>
    %c508_i32 = arith.constant 508 : i32
    %4 = tpu.dynamic_rotate %0 by %c508_i32 dim 1 : vector<8x512xf32>, i32 -> vector<8x512xf32>
    %c1 = arith.constant 1 : index
    %c0_3 = arith.constant 0 : index
    %5 = vector.load %arg2[%c1, %c0_3] : memref<9x512xf32, #tpu.memory_space<vmem>>, vector<1x512xf32>
    %6 = vector.broadcast %5 : vector<1x512xf32> to vector<8x512xf32>
    %7 = arith.mulf %4, %6 : vector<8x512xf32>
    %8 = arith.addf %3, %7 : vector<8x512xf32>
    %c4_i32 = arith.constant 4 : i32
    %9 = tpu.dynamic_rotate %0 by %c4_i32 dim 1 : vector<8x512xf32>, i32 -> vector<8x512xf32>
    %c5 = arith.constant 5 : index
    %c0_4 = arith.constant 0 : index
    %10 = vector.load %arg2[%c5, %c0_4] : memref<9x512xf32, #tpu.memory_space<vmem>>, vector<1x512xf32>
    %11 = vector.broadcast %10 : vector<1x512xf32> to vector<8x512xf32>
    %12 = arith.mulf %9, %11 : vector<8x512xf32>
    %13 = arith.addf %8, %12 : vector<8x512xf32>
    %c504_i32 = arith.constant 504 : i32
    %14 = tpu.dynamic_rotate %0 by %c504_i32 dim 1 : vector<8x512xf32>, i32 -> vector<8x512xf32>
    %c2 = arith.constant 2 : index
    %c0_5 = arith.constant 0 : index
    %15 = vector.load %arg2[%c2, %c0_5] : memref<9x512xf32, #tpu.memory_space<vmem>>, vector<1x512xf32>
    %16 = vector.broadcast %15 : vector<1x512xf32> to vector<8x512xf32>
    %17 = arith.mulf %14, %16 : vector<8x512xf32>
    %18 = arith.addf %13, %17 : vector<8x512xf32>
    %c8_i32 = arith.constant 8 : i32
    %19 = tpu.dynamic_rotate %0 by %c8_i32 dim 1 : vector<8x512xf32>, i32 -> vector<8x512xf32>
    %c6 = arith.constant 6 : index
    %c0_6 = arith.constant 0 : index
    %20 = vector.load %arg2[%c6, %c0_6] : memref<9x512xf32, #tpu.memory_space<vmem>>, vector<1x512xf32>
    %21 = vector.broadcast %20 : vector<1x512xf32> to vector<8x512xf32>
    %22 = arith.mulf %19, %21 : vector<8x512xf32>
    %23 = arith.addf %18, %22 : vector<8x512xf32>
    %c500_i32 = arith.constant 500 : i32
    %24 = tpu.dynamic_rotate %0 by %c500_i32 dim 1 : vector<8x512xf32>, i32 -> vector<8x512xf32>
    %c3 = arith.constant 3 : index
    %c0_7 = arith.constant 0 : index
    %25 = vector.load %arg2[%c3, %c0_7] : memref<9x512xf32, #tpu.memory_space<vmem>>, vector<1x512xf32>
    %26 = vector.broadcast %25 : vector<1x512xf32> to vector<8x512xf32>
    %27 = arith.mulf %24, %26 : vector<8x512xf32>
    %28 = arith.addf %23, %27 : vector<8x512xf32>
    %c12_i32 = arith.constant 12 : i32
    %29 = tpu.dynamic_rotate %0 by %c12_i32 dim 1 : vector<8x512xf32>, i32 -> vector<8x512xf32>
    %c7 = arith.constant 7 : index
    %c0_8 = arith.constant 0 : index
    %30 = vector.load %arg2[%c7, %c0_8] : memref<9x512xf32, #tpu.memory_space<vmem>>, vector<1x512xf32>
    %31 = vector.broadcast %30 : vector<1x512xf32> to vector<8x512xf32>
    %32 = arith.mulf %29, %31 : vector<8x512xf32>
    %33 = arith.addf %28, %32 : vector<8x512xf32>
    %c496_i32 = arith.constant 496 : i32
    %34 = tpu.dynamic_rotate %0 by %c496_i32 dim 1 : vector<8x512xf32>, i32 -> vector<8x512xf32>
    %c4 = arith.constant 4 : index
    %c0_9 = arith.constant 0 : index
    %35 = vector.load %arg2[%c4, %c0_9] : memref<9x512xf32, #tpu.memory_space<vmem>>, vector<1x512xf32>
    %36 = vector.broadcast %35 : vector<1x512xf32> to vector<8x512xf32>
    %37 = arith.mulf %34, %36 : vector<8x512xf32>
    %38 = arith.addf %33, %37 : vector<8x512xf32>
    %c16_i32 = arith.constant 16 : i32
    %39 = tpu.dynamic_rotate %0 by %c16_i32 dim 1 : vector<8x512xf32>, i32 -> vector<8x512xf32>
    %c8 = arith.constant 8 : index
    %c0_10 = arith.constant 0 : index
    %40 = vector.load %arg2[%c8, %c0_10] : memref<9x512xf32, #tpu.memory_space<vmem>>, vector<1x512xf32>
    %41 = vector.broadcast %40 : vector<1x512xf32> to vector<8x512xf32>
    %42 = arith.mulf %39, %41 : vector<8x512xf32>
    %43 = arith.addf %38, %42 : vector<8x512xf32>
    %c0_11 = arith.constant 0 : index
    %c0_12 = arith.constant 0 : index
    %44 = vector.load %arg3[%c0_11, %c0_12] : memref<8x512xf32, #tpu.memory_space<vmem>>, vector<8x512xf32>
    tpu.vector_store %arg3[%c0_11, %c0_12], %43 {strides = array<i32>} : memref<8x512xf32, #tpu.memory_space<vmem>>, vector<8x512xf32>,
    %45 = arith.subf %0, %43 : vector<8x512xf32>
    %c0_13 = arith.constant 0 : index
    %c0_14 = arith.constant 0 : index
    %46 = vector.load %arg4[%c0_13, %c0_14] : memref<8x512xf32, #tpu.memory_space<vmem>>, vector<8x512xf32>
    tpu.vector_store %arg4[%c0_13, %c0_14], %45 {strides = array<i32>} : memref<8x512xf32, #tpu.memory_space<vmem>>, vector<8x512xf32>,
    return
  }
  func.func @transform_0(%arg0: i32) -> (i32, i32) {
    %c0_i32 = arith.constant 0 : i32
    %c0_i32_0 = arith.constant 0 : i32
    return %arg0, %c0_i32 : i32, i32
  }
  func.func @transform_1(%arg0: i32) -> (i32, i32) {
    %c0_i32 = arith.constant 0 : i32
    %c0_i32_0 = arith.constant 0 : i32
    %c0_i32_1 = arith.constant 0 : i32
    return %c0_i32, %c0_i32_0 : i32, i32
  }
  func.func @transform_2(%arg0: i32) -> (i32, i32) {
    %c0_i32 = arith.constant 0 : i32
    %c0_i32_0 = arith.constant 0 : i32
    return %arg0, %c0_i32 : i32, i32
  }
  func.func @transform_3(%arg0: i32) -> (i32, i32) {
    %c0_i32 = arith.constant 0 : i32
    %c0_i32_0 = arith.constant 0 : i32
    return %arg0, %c0_i32 : i32, i32
  }
}

</mosaic_0001>

<llo_original>
// kernel: tpu_custom_call.1
$region0: #{tpu_custom_call.1}
  #allocation0 [shape = 'u32[]', space=smem, size = 0x4, offset = 0x4, fixed_abs, tag = 'smem constant byte address 0x4 - core index']
  #allocation1 [shape = 'u32[144,128]{1,0:T(1,128)}', space=vmem, size = 0x12000, scoped, tag = 'internal scratch']
  %s0 = inlined_call_operand.hbm [shape: f32[8,512], index: 0, kind: input, shape index: {}]
  %s1 = inlined_call_operand.hbm [shape: f32[9,512], index: 1, kind: input, shape index: {}]
  %s2 = inlined_call_operand.hbm [shape: f32[8,512], index: 2, kind: output, shape index: {0}]
  %s3 = inlined_call_operand.hbm [shape: f32[8,512], index: 3, kind: output, shape index: {1}]
  %4 = xla_tuple %s2, %s3
  %s5 = sld [smem:[#allocation0]]
  $region34: #{tpu_custom_call.1} parent=0
    _
  %s7 = ssub.s32 1, %s5
  %s8 = scalar_select 0, %s7, %s5
  $region1: #{tpu_custom_call.1} parent=0
    #allocation2 [shape = 'u8[16384]{0}', space=vmem, size = 0x4000, scoped, tag = 'input window, operand 0, single buffered']
    #allocation3 [shape = 's32[1]{0}', space=sflag, size = 0x4, scoped, tag = 'scoped memory for tpu_custom_call.1']
    #allocation4 [shape = 's32[1]{0}', space=sflag, size = 0x4, scoped, tag = 'scoped memory for tpu_custom_call.1']
    #allocation5 [shape = 'u8[32768]{0}', space=vmem, size = 0x8000, scoped, tag = 'input window, operand 1, single buffered']
    #allocation6 [shape = 's32[1]{0}', space=sflag, size = 0x4, scoped, tag = 'scoped memory for tpu_custom_call.1']
    #allocation7 [shape = 'u8[16384]{0}', space=vmem, size = 0x4000, scoped, tag = 'output window, operand 0, single buffered']
    #allocation8 [shape = 'u8[16384]{0}', space=vmem, size = 0x4000, scoped, tag = 'output window, operand 1, single buffered']
    #allocation9 [shape = 's32[1]{0}', space=sflag, size = 0x4, scoped, tag = 'scoped memory for tpu_custom_call.1']
    %9 = vsyncpa [#allocation3], 0
    %10 = vsyncpa [#allocation6], 0
    %11 = vsyncpa [#allocation4], 0
    %12 = vsyncpa [#allocation9], 0
    // Predicated region
    $region2: #{tpu_custom_call.1} parent=1 // pred_check
      _
    $region3: #{tpu_custom_call.1} parent=1 // pred_check_branch
      %14 = sbr.rel (0) target = $region5
    $region4: #{tpu_custom_call.1} parent=1 // pred_region
      %s16 = ssub.s32 512, 512
      %17 = vsyncadd [#allocation3], %s16
      %s19 = sshll.u32 [#allocation2], 4
      %s20 = int_to_ptr.vmem [resolvable:$true] %s19
      %22 = dma.hbm_to_vmem [thread:$0]  %s0, 512, %s20, [#allocation3]
    $region5: #{tpu_custom_call.1} parent=1 // pred_fallthru
      _
    // Predicated region
    $region6: #{tpu_custom_call.1} parent=1 // pred_check
      _
    $region7: #{tpu_custom_call.1} parent=1 // pred_check_branch
      %24 = sbr.rel (0) target = $region9
    $region8: #{tpu_custom_call.1} parent=1 // pred_region
      %s26 = ssub.s32 1024, 1024
      %27 = vsyncadd [#allocation6], %s26
      %s28 = sshll.u32 [#allocation5], 4
      %s29 = int_to_ptr.vmem [resolvable:$true] %s28
      %34 = dma.hbm_to_vmem [thread:$0]  %s1, 1024, %s29, [#allocation6], 512, 512, 32
    $region9: #{tpu_custom_call.1} parent=1 // pred_fallthru
      _
    // Predicated region
    $region10: #{tpu_custom_call.1} parent=1 // pred_check
      _
    $region11: #{tpu_custom_call.1} parent=1 // pred_check_branch
      %36 = sbr.rel (0) target = $region13
    $region12: #{tpu_custom_call.1} parent=1 // pred_region
      %37 = dma.done [#allocation3], 512
    $region13: #{tpu_custom_call.1} parent=1 // pred_fallthru
      _
    // Predicated region
    $region14: #{tpu_custom_call.1} parent=1 // pred_check
      _
    $region15: #{tpu_custom_call.1} parent=1 // pred_check_branch
      %39 = sbr.rel (0) target = $region17
    $region16: #{tpu_custom_call.1} parent=1 // pred_region
      %40 = dma.done [#allocation6], 1024
    $region17: #{tpu_custom_call.1} parent=1 // pred_fallthru
      _
    %v41 = vld [vmem:[#allocation2] sm:$0xff]
    %v42 = vld [vmem:[#allocation2 + $0x8] sm:$0xff]
    %v43 = vld [vmem:[#allocation2 + $0x10] sm:$0xff]
    %v44 = vld [vmem:[#allocation2 + $0x18] sm:$0xff]
    %v45 = vld [vmem:[#allocation5] ss:$8 sm:$0xf]
    %v47 = vlaneseq
    %v48 = vshrl.u32 %v47, 7
    %v49 = vsub.s32 0, %v48
    %v50 = vrot.slane %v45, %v49
    %v51 = vlaneseq
    %v52 = vshrl.u32 %v51, 7
    %v53 = vsub.s32 1, %v52
    %v54 = vrot.slane %v45, %v53
    %v55 = vlaneseq
    %v56 = vshrl.u32 %v55, 7
    %v57 = vsub.s32 2, %v56
    %v58 = vrot.slane %v45, %v57
    %v59 = vlaneseq
    %v60 = vshrl.u32 %v59, 7
    %v61 = vsub.s32 3, %v60
    %v62 = vrot.slane %v45, %v61
    %v67 = vmul.f32 %v41, %v50
    %v68 = vmul.f32 %v42, %v54
    %v69 = vmul.f32 %v43, %v58
    %v70 = vmul.f32 %v44, %v62
    %71 = vrot.lane.b32.xlu0 %v41, 124
    %v72 = vpop.permute.xlu0 %71
    %73 = vrot.lane.b32.xlu0 %v42, 124
    %v74 = vpop.permute.xlu0 %73
    %75 = vrot.lane.b32.xlu0 %v43, 124
    %v76 = vpop.permute.xlu0 %75
    %77 = vrot.lane.b32.xlu0 %v44, 124
    %v78 = vpop.permute.xlu0 %77
    %v79 = vlaneseq
    %v80 = vand.u32 %v79, 127
    %vm81 = vcmp.lt.s32.totalorder %v80, 124
    %v82 = vsel %vm81, %v76, %v78
    %v83 = vsel %vm81, %v74, %v76
    %v84 = vsel %vm81, %v72, %v74
    %v85 = vsel %vm81, %v78, %v72
    %s86 = scalar_lea.vmem [#allocation5], 1
    %v87 = vld [vmem:[%s86] ss:$8 sm:$0xf]
    %v89 = vlaneseq
    %v90 = vshrl.u32 %v89, 7
    %v91 = vsub.s32 0, %v90
    %v92 = vrot.slane %v87, %v91
    %v93 = vlaneseq
    %v94 = vshrl.u32 %v93, 7
    %v95 = vsub.s32 1, %v94
    %v96 = vrot.slane %v87, %v95
    %v97 = vlaneseq
    %v98 = vshrl.u32 %v97, 7
    %v99 = vsub.s32 2, %v98
    %v100 = vrot.slane %v87, %v99
    %v101 = vlaneseq
    %v102 = vshrl.u32 %v101, 7
    %v103 = vsub.s32 3, %v102
    %v104 = vrot.slane %v87, %v103
    %v109 = vmul.f32 %v84, %v92
    %v110 = vmul.f32 %v83, %v96
    %v111 = vmul.f32 %v82, %v100
    %v112 = vmul.f32 %v85, %v104
    %v113 = vadd.f32 %v67, %v109
    %v114 = vadd.f32 %v68, %v110
    %v115 = vadd.f32 %v69, %v111
    %v116 = vadd.f32 %v70, %v112
    %117 = vrot.lane.b32.xlu0 %v41, 4
    %v118 = vpop.permute.xlu0 %117
    %119 = vrot.lane.b32.xlu0 %v42, 4
    %v120 = vpop.permute.xlu0 %119
    %121 = vrot.lane.b32.xlu0 %v43, 4
    %v122 = vpop.permute.xlu0 %121
    %123 = vrot.lane.b32.xlu0 %v44, 4
    %v124 = vpop.permute.xlu0 %123
    %vm125 = vcmp.lt.s32.totalorder %v80, 4
    %v126 = vsel %vm125, %v122, %v124
    %v127 = vsel %vm125, %v120, %v122
    %v128 = vsel %vm125, %v118, %v120
    %v129 = vsel %vm125, %v124, %v118
    %s130 = scalar_lea.vmem [#allocation5], 5
    %v131 = vld [vmem:[%s130] ss:$8 sm:$0xf]
    %v133 = vlaneseq
    %v134 = vshrl.u32 %v133, 7
    %v135 = vsub.s32 0, %v134
    %v136 = vrot.slane %v131, %v135
    %v137 = vlaneseq
    %v138 = vshrl.u32 %v137, 7
    %v139 = vsub.s32 1, %v138
    %v140 = vrot.slane %v131, %v139
    %v141 = vlaneseq
    %v142 = vshrl.u32 %v141, 7
    %v143 = vsub.s32 2, %v142
    %v144 = vrot.slane %v131, %v143
    %v145 = vlaneseq
    %v146 = vshrl.u32 %v145, 7
    %v147 = vsub.s32 3, %v146
    %v148 = vrot.slane %v131, %v147
    %v153 = vmul.f32 %v129, %v136
    %v154 = vmul.f32 %v128, %v140
    %v155 = vmul.f32 %v127, %v144
    %v156 = vmul.f32 %v126, %v148
    %v157 = vadd.f32 %v113, %v153
    %v158 = vadd.f32 %v114, %v154
    %v159 = vadd.f32 %v115, %v155
    %v160 = vadd.f32 %v116, %v156
    %161 = vrot.lane.b32.xlu0 %v41, 120
    %v162 = vpop.permute.xlu0 %161
    %163 = vrot.lane.b32.xlu0 %v42, 120
    %v164 = vpop.permute.xlu0 %163
    %165 = vrot.lane.b32.xlu0 %v43, 120
    %v166 = vpop.permute.xlu0 %165
    %167 = vrot.lane.b32.xlu0 %v44, 120
    %v168 = vpop.permute.xlu0 %167
    %vm169 = vcmp.lt.s32.totalorder %v80, 120
    %v170 = vsel %vm169, %v166, %v168
    %v171 = vsel %vm169, %v164, %v166
    %v172 = vsel %vm169, %v162, %v164
    %v173 = vsel %vm169, %v168, %v162
    %s174 = scalar_lea.vmem [#allocation5], 2
    %v175 = vld [vmem:[%s174] ss:$8 sm:$0xf]
    %v177 = vlaneseq
    %v178 = vshrl.u32 %v177, 7
    %v179 = vsub.s32 0, %v178
    %v180 = vrot.slane %v175, %v179
    %v181 = vlaneseq
    %v182 = vshrl.u32 %v181, 7
    %v183 = vsub.s32 1, %v182
    %v184 = vrot.slane %v175, %v183
    %v185 = vlaneseq
    %v186 = vshrl.u32 %v185, 7
    %v187 = vsub.s32 2, %v186
    %v188 = vrot.slane %v175, %v187
    %v189 = vlaneseq
    %v190 = vshrl.u32 %v189, 7
    %v191 = vsub.s32 3, %v190
    %v192 = vrot.slane %v175, %v191
    %v197 = vmul.f32 %v172, %v180
    %v198 = vmul.f32 %v171, %v184
    %v199 = vmul.f32 %v170, %v188
    %v200 = vmul.f32 %v173, %v192
    %v201 = vadd.f32 %v157, %v197
    %v202 = vadd.f32 %v158, %v198
    %v203 = vadd.f32 %v159, %v199
    %v204 = vadd.f32 %v160, %v200
    %205 = vrot.lane.b32.xlu0 %v41, 8
    %v206 = vpop.permute.xlu0 %205
    %207 = vrot.lane.b32.xlu0 %v42, 8
    %v208 = vpop.permute.xlu0 %207
    %209 = vrot.lane.b32.xlu0 %v43, 8
    %v210 = vpop.permute.xlu0 %209
    %211 = vrot.lane.b32.xlu0 %v44, 8
    %v212 = vpop.permute.xlu0 %211
    %vm213 = vcmp.lt.s32.totalorder %v80, 8
    %v214 = vsel %vm213, %v210, %v212
    %v215 = vsel %vm213, %v208, %v210
    %v216 = vsel %vm213, %v206, %v208
    %v217 = vsel %vm213, %v212, %v206
    %s218 = scalar_lea.vmem [#allocation5], 6
    %v219 = vld [vmem:[%s218] ss:$8 sm:$0xf]
    %v221 = vlaneseq
    %v222 = vshrl.u32 %v221, 7
    %v223 = vsub.s32 0, %v222
    %v224 = vrot.slane %v219, %v223
    %v225 = vlaneseq
    %v226 = vshrl.u32 %v225, 7
    %v227 = vsub.s32 1, %v226
    %v228 = vrot.slane %v219, %v227
    %v229 = vlaneseq
    %v230 = vshrl.u32 %v229, 7
    %v231 = vsub.s32 2, %v230
    %v232 = vrot.slane %v219, %v231
    %v233 = vlaneseq
    %v234 = vshrl.u32 %v233, 7
    %v235 = vsub.s32 3, %v234
    %v236 = vrot.slane %v219, %v235
    %v241 = vmul.f32 %v217, %v224
    %v242 = vmul.f32 %v216, %v228
    %v243 = vmul.f32 %v215, %v232
    %v244 = vmul.f32 %v214, %v236
    %v245 = vadd.f32 %v201, %v241
    %v246 = vadd.f32 %v202, %v242
    %v247 = vadd.f32 %v203, %v243
    %v248 = vadd.f32 %v204, %v244
    %249 = vrot.lane.b32.xlu0 %v41, 116
    %v250 = vpop.permute.xlu0 %249
    %251 = vrot.lane.b32.xlu0 %v42, 116
    %v252 = vpop.permute.xlu0 %251
    %253 = vrot.lane.b32.xlu0 %v43, 116
    %v254 = vpop.permute.xlu0 %253
    %255 = vrot.lane.b32.xlu0 %v44, 116
    %v256 = vpop.permute.xlu0 %255
    %vm257 = vcmp.lt.s32.totalorder %v80, 116
    %v258 = vsel %vm257, %v254, %v256
    %v259 = vsel %vm257, %v252, %v254
    %v260 = vsel %vm257, %v250, %v252
    %v261 = vsel %vm257, %v256, %v250
    %s262 = scalar_lea.vmem [#allocation5], 3
    %v263 = vld [vmem:[%s262] ss:$8 sm:$0xf]
    %v265 = vlaneseq
    %v266 = vshrl.u32 %v265, 7
    %v267 = vsub.s32 0, %v266
    %v268 = vrot.slane %v263, %v267
    %v269 = vlaneseq
    %v270 = vshrl.u32 %v269, 7
    %v271 = vsub.s32 1, %v270
    %v272 = vrot.slane %v263, %v271
    %v273 = vlaneseq
    %v274 = vshrl.u32 %v273, 7
    %v275 = vsub.s32 2, %v274
    %v276 = vrot.slane %v263, %v275
    %v277 = vlaneseq
    %v278 = vshrl.u32 %v277, 7
    %v279 = vsub.s32 3, %v278
    %v280 = vrot.slane %v263, %v279
    %v285 = vmul.f32 %v260, %v268
    %v286 = vmul.f32 %v259, %v272
    %v287 = vmul.f32 %v258, %v276
    %v288 = vmul.f32 %v261, %v280
    %v289 = vadd.f32 %v245, %v285
    %v290 = vadd.f32 %v246, %v286
    %v291 = vadd.f32 %v247, %v287
    %v292 = vadd.f32 %v248, %v288
    %293 = vrot.lane.b32.xlu0 %v41, 12
    %v294 = vpop.permute.xlu0 %293
    %295 = vrot.lane.b32.xlu0 %v42, 12
    %v296 = vpop.permute.xlu0 %295
    %297 = vrot.lane.b32.xlu0 %v43, 12
    %v298 = vpop.permute.xlu0 %297
    %299 = vrot.lane.b32.xlu0 %v44, 12
    %v300 = vpop.permute.xlu0 %299
    %vm301 = vcmp.lt.s32.totalorder %v80, 12
    %v302 = vsel %vm301, %v298, %v300
    %v303 = vsel %vm301, %v296, %v298
    %v304 = vsel %vm301, %v294, %v296
    %v305 = vsel %vm301, %v300, %v294
    %s306 = scalar_lea.vmem [#allocation5], 7
    %v307 = vld [vmem:[%s306] ss:$8 sm:$0xf]
    %v309 = vlaneseq
    %v310 = vshrl.u32 %v309, 7
    %v311 = vsub.s32 0, %v310
    %v312 = vrot.slane %v307, %v311
    %v313 = vlaneseq
    %v314 = vshrl.u32 %v313, 7
    %v315 = vsub.s32 1, %v314
    %v316 = vrot.slane %v307, %v315
    %v317 = vlaneseq
    %v318 = vshrl.u32 %v317, 7
    %v319 = vsub.s32 2, %v318
    %v320 = vrot.slane %v307, %v319
    %v321 = vlaneseq
    %v322 = vshrl.u32 %v321, 7
    %v323 = vsub.s32 3, %v322
    %v324 = vrot.slane %v307, %v323
    %v329 = vmul.f32 %v305, %v312
    %v330 = vmul.f32 %v304, %v316
    %v331 = vmul.f32 %v303, %v320
    %v332 = vmul.f32 %v302, %v324
    %v333 = vadd.f32 %v289, %v329
    %v334 = vadd.f32 %v290, %v330
    %v335 = vadd.f32 %v291, %v331
    %v336 = vadd.f32 %v292, %v332
    %337 = vrot.lane.b32.xlu0 %v41, 112
    %v338 = vpop.permute.xlu0 %337
    %339 = vrot.lane.b32.xlu0 %v42, 112
    %v340 = vpop.permute.xlu0 %339
    %341 = vrot.lane.b32.xlu0 %v43, 112
    %v342 = vpop.permute.xlu0 %341
    %343 = vrot.lane.b32.xlu0 %v44, 112
    %v344 = vpop.permute.xlu0 %343
    %vm345 = vcmp.lt.s32.totalorder %v80, 112
    %v346 = vsel %vm345, %v342, %v344
    %v347 = vsel %vm345, %v340, %v342
    %v348 = vsel %vm345, %v338, %v340
    %v349 = vsel %vm345, %v344, %v338
    %s350 = scalar_lea.vmem [#allocation5], 4
    %v351 = vld [vmem:[%s350] ss:$8 sm:$0xf]
    %v353 = vlaneseq
    %v354 = vshrl.u32 %v353, 7
    %v355 = vsub.s32 0, %v354
    %v356 = vrot.slane %v351, %v355
    %v357 = vlaneseq
    %v358 = vshrl.u32 %v357, 7
    %v359 = vsub.s32 1, %v358
    %v360 = vrot.slane %v351, %v359
    %v361 = vlaneseq
    %v362 = vshrl.u32 %v361, 7
    %v363 = vsub.s32 2, %v362
    %v364 = vrot.slane %v351, %v363
    %v365 = vlaneseq
    %v366 = vshrl.u32 %v365, 7
    %v367 = vsub.s32 3, %v366
    %v368 = vrot.slane %v351, %v367
    %v373 = vmul.f32 %v348, %v356
    %v374 = vmul.f32 %v347, %v360
    %v375 = vmul.f32 %v346, %v364
    %v376 = vmul.f32 %v349, %v368
    %v377 = vadd.f32 %v333, %v373
    %v378 = vadd.f32 %v334, %v374
    %v379 = vadd.f32 %v335, %v375
    %v380 = vadd.f32 %v336, %v376
    %381 = vrot.lane.b32.xlu0 %v41, 16
    %v382 = vpop.permute.xlu0 %381
    %383 = vrot.lane.b32.xlu0 %v42, 16
    %v384 = vpop.permute.xlu0 %383
    %385 = vrot.lane.b32.xlu0 %v43, 16
    %v386 = vpop.permute.xlu0 %385
    %387 = vrot.lane.b32.xlu0 %v44, 16
    %v388 = vpop.permute.xlu0 %387
    %vm389 = vcmp.lt.s32.totalorder %v80, 16
    %v390 = vsel %vm389, %v386, %v388
    %v391 = vsel %vm389, %v384, %v386
    %v392 = vsel %vm389, %v382, %v384
    %v393 = vsel %vm389, %v388, %v382
    %s394 = scalar_lea.vmem [#allocation5], 32
    %v395 = vld [vmem:[%s394] ss:$8 sm:$0xf]
    %v397 = vlaneseq
    %v398 = vshrl.u32 %v397, 7
    %v399 = vsub.s32 0, %v398
    %v400 = vrot.slane %v395, %v399
    %v401 = vlaneseq
    %v402 = vshrl.u32 %v401, 7
    %v403 = vsub.s32 1, %v402
    %v404 = vrot.slane %v395, %v403
    %v405 = vlaneseq
    %v406 = vshrl.u32 %v405, 7
    %v407 = vsub.s32 2, %v406
    %v408 = vrot.slane %v395, %v407
    %v409 = vlaneseq
    %v410 = vshrl.u32 %v409, 7
    %v411 = vsub.s32 3, %v410
    %v412 = vrot.slane %v395, %v411
    %v417 = vmul.f32 %v393, %v400
    %v418 = vmul.f32 %v392, %v404
    %v419 = vmul.f32 %v391, %v408
    %v420 = vmul.f32 %v390, %v412
    %v421 = vadd.f32 %v377, %v417
    %v422 = vadd.f32 %v378, %v418
    %v423 = vadd.f32 %v379, %v419
    %v424 = vadd.f32 %v380, %v420
    %425 = vst [vmem:[#allocation7] sm:$0xff] %v421
    %426 = vst [vmem:[#allocation7 + $0x8] sm:$0xff] %v422
    %427 = vst [vmem:[#allocation7 + $0x10] sm:$0xff] %v423
    %428 = vst [vmem:[#allocation7 + $0x18] sm:$0xff] %v424
    %v429 = vsub.f32 %v41, %v421
    %v430 = vsub.f32 %v42, %v422
    %v431 = vsub.f32 %v43, %v423
    %v432 = vsub.f32 %v44, %v424
    %433 = vst [vmem:[#allocation8] sm:$0xff] %v429
    %434 = vst [vmem:[#allocation8 + $0x8] sm:$0xff] %v430
    %435 = vst [vmem:[#allocation8 + $0x10] sm:$0xff] %v431
    %436 = vst [vmem:[#allocation8 + $0x18] sm:$0xff] %v432
    // Predicated region
    $region18: #{tpu_custom_call.1} parent=1 // pred_check
      _
    $region19: #{tpu_custom_call.1} parent=1 // pred_check_branch
      %438 = sbr.rel (0) target = $region21
    $region20: #{tpu_custom_call.1} parent=1 // pred_region
      %s440 = ssub.s32 512, 512
      %441 = vsyncadd [#allocation4], %s440
      %s443 = sshll.u32 [#allocation7], 4
      %s444 = int_to_ptr.vmem [resolvable:$true] %s443
      %446 = dma.vmem_to_hbm [thread:$0]  %s444, 512, %s2, [#allocation4]
    $region21: #{tpu_custom_call.1} parent=1 // pred_fallthru
      _
    // Predicated region
    $region22: #{tpu_custom_call.1} parent=1 // pred_check
      _
    $region23: #{tpu_custom_call.1} parent=1 // pred_check_branch
      %448 = sbr.rel (0) target = $region25
    $region24: #{tpu_custom_call.1} parent=1 // pred_region
      %s450 = ssub.s32 512, 512
      %451 = vsyncadd [#allocation9], %s450
      %s453 = sshll.u32 [#allocation8], 4
      %s454 = int_to_ptr.vmem [resolvable:$true] %s453
      %456 = dma.vmem_to_hbm [thread:$0]  %s454, 512, %s3, [#allocation9]
    $region25: #{tpu_custom_call.1} parent=1 // pred_fallthru
      _
    // Predicated region
    $region26: #{tpu_custom_call.1} parent=1 // pred_check
      _
    $region27: #{tpu_custom_call.1} parent=1 // pred_check_branch
      %458 = sbr.rel (0) target = $region29
    $region28: #{tpu_custom_call.1} parent=1 // pred_region
      %459 = dma.done [#allocation4], 512
    $region29: #{tpu_custom_call.1} parent=1 // pred_fallthru
      _
    // Predicated region
    $region30: #{tpu_custom_call.1} parent=1 // pred_check
      _
    $region31: #{tpu_custom_call.1} parent=1 // pred_check_branch
      %461 = sbr.rel (0) target = $region33
    $region32: #{tpu_custom_call.1} parent=1 // pred_region
      %462 = dma.done [#allocation9], 512
    $region33: #{tpu_custom_call.1} parent=1 // pred_fallthru
      _
    %463 = vsyncpa [#allocation3], 1
    %464 = vsyncpa [#allocation6], 1
    %465 = vsyncpa [#allocation4], 1
    %466 = vsyncpa [#allocation9], 1

</llo_original>
